<compile_context>
chip_gen: v6e
topology: v6e:2x2x1
jax: 0.10.0
libtpu: 0.0.40
codegen_flags: <defaults>
</compile_context>

<pallas_src>
import jax
import jax.numpy as jnp
from jax.experimental import pallas as pl
from jax.experimental.pallas import tpu as pltpu

HIDDEN = 64  # fixed by the module (conv1/conv2/conv3 use 64 hidden channels)


def _round_up(x, m):
    return ((x + m - 1) // m) * m


def _choose_tile(hw, b, cap):
    """Pick (tile, hw_pad): tile divides hw_pad and is either a multiple of
    128 or equal to the full (padded) pixel axis, preferring choices that
    avoid a wrapper-side pad copy of x."""
    cap = max(128, (int(cap) // 128) * 128)
    hw128 = _round_up(hw, 128)

    # v7x runs 2 TensorCores: with b == 1 the pixel axis must supply >= 2
    # parallel grid steps or one core idles.
    if b == 1 and hw128 >= 256:
        cap = min(cap, max(128, ((hw128 // 2) // 128) * 128))

    # 1) Whole pixel axis in one tile (block dim == full dim, no pad needed).
    if hw <= cap:
        return hw, hw

    # 2) hw is a multiple of 128: largest 128-multiple divisor <= cap
    #    (no pad copy).  Only taken if it isn't pathologically small.
    if hw % 128 == 0:
        limit = min(cap, hw)
        best = 0
        t = 128
        while t <= limit:
            if hw % t == 0:
                best = t
            t += 128
        if best >= max(128, limit // 4):
            return best, hw

    # 3) Fallback: pad the pixel axis up to a multiple of the capped tile.
    #    Zero-padded columns compute to exact zeros and are sliced off.
    tile = min(cap, hw128)
    return tile, _round_up(hw, tile)


def _attentionmap_kernel(x_ref, w1_ref, w2_ref, w3_ref, o_ref):
    # x_ref:  (1, ch, T) f32 tile of pixels, pixels on the lane axis.
    # w1_ref: (64, ch), w2_ref: (64, 64), w3_ref: (ch, 64) -- bf16, resident
    #         (identical to the PyTorch Conv3d (out, in) layout, no transpose).
    x = x_ref[0]                                       # (ch, T) f32
    xb = x.astype(jnp.bfloat16)                        # MXU operand
    h1 = jnp.dot(w1_ref[...], xb, preferred_element_type=jnp.float32)  # (64,T)
    h1 = jnp.maximum(h1, 0.0).astype(jnp.bfloat16)     # relu in f32, bf16 next operand
    h2 = jnp.dot(w2_ref[...], h1, preferred_element_type=jnp.float32)  # (64,T)
    h2 = jnp.maximum(h2, 0.0).astype(jnp.bfloat16)
    y = jnp.dot(w3_ref[...], h2, preferred_element_type=jnp.float32)   # (ch,T)
    o_ref[0] = (y + x).astype(o_ref.dtype)             # residual add in f32


def attentionmap_pallas(x_nchw, w1, w2, w3, *, tile_hw=8192):
    """x_nchw: (b, ch, h, w) float32.
    w1: (64, ch), w2: (64, 64), w3: (ch, 64) -- PyTorch Conv3d weights with
    the trailing 1x1x1 spatial dims dropped (used as-is, no transpose)."""
    b, ch, h, w = x_nchw.shape
    hw = h * w

    # Free reshape: keeps the NCHW memory layout, just flattens spatial dims.
    x3 = x_nchw.reshape(b, ch, hw)

    # Cast the (tiny) weights to bf16 once, outside the kernel.
    w1b = w1.astype(jnp.bfloat16)
    w2b = w2.astype(jnp.bfloat16)
    w3b = w3.astype(jnp.bfloat16)

    tile, hw_pad = _choose_tile(hw, b, tile_hw)
    if hw_pad != hw:
        x3 = jnp.pad(x3, ((0, 0), (0, 0), (0, hw_pad - hw)))

    grid = (b, hw_pad // tile)

    y3 = pl.pallas_call(
        _attentionmap_kernel,
        out_shape=jax.ShapeDtypeStruct((b, ch, hw_pad), x3.dtype),
        grid_spec=pltpu.PrefetchScalarGridSpec(
            num_scalar_prefetch=0,
            grid=grid,
            in_specs=[
                pl.BlockSpec((1, ch, tile), lambda bi, ti: (bi, 0, ti)),
                pl.BlockSpec((HIDDEN, ch), lambda bi, ti: (0, 0)),
                pl.BlockSpec((HIDDEN, HIDDEN), lambda bi, ti: (0, 0)),
                pl.BlockSpec((ch, HIDDEN), lambda bi, ti: (0, 0)),
            ],
            out_specs=pl.BlockSpec((1, ch, tile), lambda bi, ti: (bi, 0, ti)),
        ),
        compiler_params=pltpu.CompilerParams(
            dimension_semantics=("parallel", "parallel"),
            vmem_limit_bytes=32 * 1024 * 1024,
        ),
    )(x3, w1b, w2b, w3b)

    if hw_pad != hw:
        y3 = y3[:, :, :hw]
    return y3.reshape(b, ch, h, w)


def attentionmap_ref(x_nchw, w1, w2, w3):
    """Pure-JAX f32 reference mirroring the PyTorch forward."""
    b, ch, h, w = x_nchw.shape
    x_nc = jnp.transpose(x_nchw, (0, 2, 3, 1)).reshape(-1, ch)
    h1 = jnp.maximum(x_nc @ w1.T, 0.0)
    h2 = jnp.maximum(h1 @ w2.T, 0.0)
    y = h2 @ w3.T + x_nc
    return jnp.transpose(y.reshape(b, h, w, ch), (0, 3, 1, 2))


if __name__ == "__main__":
    key = jax.random.PRNGKey(0)
    k_x, k_w1, k_w2, k_w3, k_x2 = jax.random.split(key, 5)

    b, ch, h, w = 2, 4, 16, 16
    x = jax.random.normal(k_x, (b, ch, h, w), dtype=jnp.float32)

    # Deterministic synthetic Conv3d weights (out_ch, in_ch), 1x1x1 dims dropped.
    w1 = jax.random.normal(k_w1, (HIDDEN, ch), dtype=jnp.float32) * 0.1
    w2 = jax.random.normal(k_w2, (HIDDEN, HIDDEN), dtype=jnp.float32) * 0.1
    w3 = jax.random.normal(k_w3, (ch, HIDDEN), dtype=jnp.float32) * 0.1

    y = jax.block_until_ready(attentionmap_pallas(x, w1, w2, w3))
    y_ref = attentionmap_ref(x, w1, w2, w3)
    assert y.shape == (b, ch, h, w)
    # bf16 matmul operands vs. f32 reference -> loosened tolerance.
    assert jnp.allclose(y, y_ref, atol=2e-2, rtol=2e-2)

    # Second case: batch 1 + non-128-multiple spatial size exercises the pad
    # fallback and the b==1 dual-TensorCore tile split.
    x2 = jax.random.normal(k_x2, (1, ch, 20, 20), dtype=jnp.float32)
    y2 = jax.block_until_ready(attentionmap_pallas(x2, w1, w2, w3))
    y2_ref = attentionmap_ref(x2, w1, w2, w3)
    assert y2.shape == (1, ch, 20, 20)
    assert jnp.allclose(y2, y2_ref, atol=2e-2, rtol=2e-2)

    print("KERNEL_OK")
</pallas_src>

<mosaic_0001>
module attributes {stable_mosaic.version = 11 : i64} {
  func.func @_attentionmap_kernel(%arg0: i32, %arg1: i32, %arg2: memref<1x4x256xf32, #tpu.memory_space<vmem>>, %arg3: memref<64x4xbf16, #tpu.memory_space<vmem>>, %arg4: memref<64x64xbf16, #tpu.memory_space<vmem>>, %arg5: memref<4x64xbf16, #tpu.memory_space<vmem>>, %arg6: memref<1x4x256xf32, #tpu.memory_space<vmem>>) attributes {dimension_semantics = [#tpu.dimension_semantics<parallel>, #tpu.dimension_semantics<parallel>], iteration_bounds = array<i64: 2, 1>, scalar_prefetch = 0 : i64, scratch_operands = 0 : i64, tpu.core_type = #tpu.core_type<tc>, window_params = [{transform_indices = @transform_0, window_bounds = array<i64: 1, 4, 256>}, {pipeline_mode = #tpu.pipeline_mode<synchronous>, transform_indices = @transform_1, window_bounds = array<i64: 64, 4>}, {pipeline_mode = #tpu.pipeline_mode<synchronous>, transform_indices = @transform_2, window_bounds = array<i64: 64, 64>}, {pipeline_mode = #tpu.pipeline_mode<synchronous>, transform_indices = @transform_3, window_bounds = array<i64: 4, 64>}, {transform_indices = @transform_4, window_bounds = array<i64: 1, 4, 256>}]} {
    %c0 = arith.constant 0 : index
    %c0_0 = arith.constant 0 : index
    %c0_1 = arith.constant 0 : index
    %0 = vector.load %arg2[%c0, %c0_0, %c0_1] : memref<1x4x256xf32, #tpu.memory_space<vmem>>, vector<1x4x256xf32>
    %1 = vector.shape_cast %0 : vector<1x4x256xf32> to vector<4x256xf32>
    %2 = arith.truncf %1 : vector<4x256xf32> to vector<4x256xbf16>
    %c0_2 = arith.constant 0 : index
    %c0_3 = arith.constant 0 : index
    %3 = vector.load %arg3[%c0_2, %c0_3] : memref<64x4xbf16, #tpu.memory_space<vmem>>, vector<64x4xbf16>
    %cst = arith.constant dense<0.000000e+00> : vector<64x256xf32>
    %4 = tpu.matmul %3, %2, %cst {dimension_numbers = #tpu.dot_dimension_numbers<[1], [0], [0], [1], [0, 0, 1, 1], [], []>} : vector<64x4xbf16>, vector<4x256xbf16>, vector<64x256xf32> -> vector<64x256xf32>
    %cst_4 = arith.constant 0.000000e+00 : f32
    %5 = vector.broadcast %cst_4 : f32 to vector<64x256xf32>
    %6 = arith.maximumf %4, %5 : vector<64x256xf32>
    %7 = arith.truncf %6 : vector<64x256xf32> to vector<64x256xbf16>
    %c0_5 = arith.constant 0 : index
    %c0_6 = arith.constant 0 : index
    %8 = vector.load %arg4[%c0_5, %c0_6] : memref<64x64xbf16, #tpu.memory_space<vmem>>, vector<64x64xbf16>
    %cst_7 = arith.constant dense<0.000000e+00> : vector<64x256xf32>
    %9 = tpu.matmul %8, %7, %cst_7 {dimension_numbers = #tpu.dot_dimension_numbers<[1], [0], [0], [1], [0, 0, 1, 1], [], []>} : vector<64x64xbf16>, vector<64x256xbf16>, vector<64x256xf32> -> vector<64x256xf32>
    %cst_8 = arith.constant 0.000000e+00 : f32
    %10 = vector.broadcast %cst_8 : f32 to vector<64x256xf32>
    %11 = arith.maximumf %9, %10 : vector<64x256xf32>
    %12 = arith.truncf %11 : vector<64x256xf32> to vector<64x256xbf16>
    %c0_9 = arith.constant 0 : index
    %c0_10 = arith.constant 0 : index
    %13 = vector.load %arg5[%c0_9, %c0_10] : memref<4x64xbf16, #tpu.memory_space<vmem>>, vector<4x64xbf16>
    %cst_11 = arith.constant dense<0.000000e+00> : vector<4x256xf32>
    %14 = tpu.matmul %13, %12, %cst_11 {dimension_numbers = #tpu.dot_dimension_numbers<[1], [0], [0], [1], [0, 0, 1, 1], [], []>} : vector<4x64xbf16>, vector<64x256xbf16>, vector<4x256xf32> -> vector<4x256xf32>
    %15 = arith.addf %14, %1 : vector<4x256xf32>
    %c0_12 = arith.constant 0 : index
    %c0_13 = arith.constant 0 : index
    %c0_14 = arith.constant 0 : index
    %16 = vector.load %arg6[%c0_12, %c0_13, %c0_14] : memref<1x4x256xf32, #tpu.memory_space<vmem>>, vector<1x4x256xf32>
    %17 = vector.shape_cast %16 : vector<1x4x256xf32> to vector<4x256xf32>
    %18 = vector.shape_cast %15 : vector<4x256xf32> to vector<1x4x256xf32>
    tpu.vector_store %arg6[%c0_12, %c0_13, %c0_14], %18 {strides = array<i32>} : memref<1x4x256xf32, #tpu.memory_space<vmem>>, vector<1x4x256xf32>,
    return
  }
  func.func @transform_0(%arg0: i32, %arg1: i32) -> (i32, i32, i32) {
    %c0_i32 = arith.constant 0 : i32
    %c0_i32_0 = arith.constant 0 : i32
    return %arg0, %c0_i32, %arg1 : i32, i32, i32
  }
  func.func @transform_1(%arg0: i32, %arg1: i32) -> (i32, i32) {
    %c0_i32 = arith.constant 0 : i32
    %c0_i32_0 = arith.constant 0 : i32
    %c0_i32_1 = arith.constant 0 : i32
    return %c0_i32, %c0_i32_0 : i32, i32
  }
  func.func @transform_2(%arg0: i32, %arg1: i32) -> (i32, i32) {
    %c0_i32 = arith.constant 0 : i32
    %c0_i32_0 = arith.constant 0 : i32
    %c0_i32_1 = arith.constant 0 : i32
    return %c0_i32, %c0_i32_0 : i32, i32
  }
  func.func @transform_3(%arg0: i32, %arg1: i32) -> (i32, i32) {
    %c0_i32 = arith.constant 0 : i32
    %c0_i32_0 = arith.constant 0 : i32
    %c0_i32_1 = arith.constant 0 : i32
    return %c0_i32, %c0_i32_0 : i32, i32
  }
  func.func @transform_4(%arg0: i32, %arg1: i32) -> (i32, i32, i32) {
    %c0_i32 = arith.constant 0 : i32
    %c0_i32_0 = arith.constant 0 : i32
    return %arg0, %c0_i32, %arg1 : i32, i32, i32
  }
}

</mosaic_0001>

<llo_original>
// kernel: tpu_custom_call.1
$region0: #{tpu_custom_call.1}
  #allocation0 [shape = 'u32[]', space=smem, size = 0x4, offset = 0x4, fixed_abs, tag = 'smem constant byte address 0x4 - core index']
  #allocation1 [shape = 'u32[144,128]{1,0:T(1,128)}', space=vmem, size = 0x12000, scoped, tag = 'internal scratch']
  %s0 = inlined_call_operand.hbm [shape: f32[2,4,256], index: 0, kind: input, shape index: {}]
  %s1 = inlined_call_operand.vmem [shape: bf16[64,4], index: 1, kind: input, shape index: {}]
  %s2 = inlined_call_operand.vmem [shape: bf16[64,64], index: 2, kind: input, shape index: {}]
  %s3 = inlined_call_operand.vmem [shape: bf16[4,64], index: 3, kind: input, shape index: {}]
  %s4 = inlined_call_operand.hbm [shape: f32[2,4,256], index: 4, kind: output, shape index: {}]
  %s5 = sld [smem:[#allocation0]]
  $region53: #{tpu_custom_call.1} parent=0
    _
  %s7 = ssub.s32 1, %s5
  %s8 = scalar_select 0, %s7, %s5
  $region1: #{tpu_custom_call.1} parent=0
    #allocation2 [shape = 'u8[8192]{0}', space=vmem, size = 0x2000, scoped, tag = 'input window, operand 0']
    #allocation3 [shape = 's32[2]{0}', space=sflag, size = 0x8, scoped, tag = 'scoped memory for tpu_custom_call.1']
    #allocation4 [shape = 's32[2]{0}', space=sflag, size = 0x8, scoped, tag = 'scoped memory for tpu_custom_call.1']
    #allocation5 [shape = 'u8[8192]{0}', space=vmem, size = 0x2000, scoped, tag = 'output window, operand 0']
    %9 = vsyncpa [#allocation3], 0
    %s10 = scalar_lea.sflag [#allocation3], 1
    %11 = vsyncpa %s10, 0
    %12 = vsyncpa [#allocation4], 0
    %s13 = scalar_lea.sflag [#allocation4], 1
    %14 = vsyncpa %s13, 0
    loop: start=0, step=1, limit=4
    $region2: #{tpu_custom_call.1} parent=1 // loop_pre_header
      _
    $region3: #{tpu_custom_call.1} parent=1 // loop_header
      %s16 = sphi 0, %s20
      %p17 = scmp.ge.s32.totalorder %s16, 4
      %s23 = sphi 0, %s35
      %s24 = sphi 0, %s31
      %s25 = sphi 0, %s23
      %s26 = sphi 0, %s24
      %s27 = sphi 0, %s25
      %s28 = sphi 0, %s26
      %s40 = sphi 0, %s42
      %s43 = sphi 0, %s40
      %s44 = sphi 0, %s43
      %s60 = sphi 0, %s44
      %s64 = sphi 0, %s64
      %s66 = sphi 0, %s64
      %s67 = sphi 0, %s66
      %s81 = sphi 0, %s67
      %s85 = sphi 0, %s85
      %s87 = sphi 0, %s85
      %s88 = sphi 0, %s87
      %s102 = sphi 0, %s88
      %s106 = sphi 0, %s106
      %s108 = sphi 0, %s106
      %s109 = sphi 0, %s108
      %s123 = sphi 0, %s109
      %s131 = sphi 0, %s133
      %s134 = sphi 0, %s131
      %s135 = sphi 0, %s134
      %s151 = sphi 0, %s135
    $region4: #{tpu_custom_call.1} parent=1 // loop_header_branch
      %19 = sbr.rel (%p17) target = $region8
    $region5: #{tpu_custom_call.1} parent=1 // loop_body
      %s21 = ssub.s32 %s16, 1
      %s22 = ssub.s32 %s16, 2
      %s29 = sadd.s32 1, %s24
      %p30 = scmp.ge.s32.totalorder %s29, 1
      %s31 = scalar_select %p30, 0, %s29
      %s32 = sadd.s32 1, %s23
      %s33 = scalar_select %p30, %s32, %s23
      %p34 = scmp.ge.s32.totalorder %s33, 2
      %s35 = scalar_select %p34, 0, %s33
      %s36 = ssub.s32 %s23, %s35
      %s37 = ssub.s32 %s24, %s31
      %s38 = sor.u32 %s36, %s37
      %p39 = scmp.eq.s32.totalorder %s38, 0
      %s41 = sadd.s32 %s40, 1
      %s42 = scalar_select %p39, %s40, %s41
      %p45 = pneg %p39
      %p46 = scmp.eq.s32.totalorder %s16, 1
      %p47 = por %p45, %p46
      %p48 = scmp.ne.s32.totalorder %s40, %s43
      %p49 = scmp.eq.s32.totalorder %s16, 0
      %p50 = por %p48, %p49
      %p51 = scmp.ne.s32.totalorder %s40, %s43
      %p52 = scmp.eq.s32.totalorder %s21, 1
      %p53 = por %p51, %p52
      %p54 = scmp.ne.s32.totalorder %s43, %s44
      %p55 = scmp.eq.s32.totalorder %s21, 0
      %p56 = por %p54, %p55
      %p57 = scmp.ne.s32.totalorder %s43, %s44
      %p58 = scmp.eq.s32.totalorder %s22, 1
      %p59 = por %p57, %p58
      %p61 = scmp.ne.s32.totalorder %s44, %s60
      %p62 = scmp.eq.s32.totalorder %s22, 0
      %p63 = por %p61, %p62
      %s65 = sadd.s32 %s64, 1
      %p68 = scmp.eq.s32.totalorder %s16, 1
      %p69 = scmp.ne.s32.totalorder %s64, %s66
      %p70 = scmp.eq.s32.totalorder %s16, 0
      %p71 = por %p69, %p70
      %p72 = scmp.ne.s32.totalorder %s64, %s66
      %p73 = scmp.eq.s32.totalorder %s21, 1
      %p74 = por %p72, %p73
      %p75 = scmp.ne.s32.totalorder %s66, %s67
      %p76 = scmp.eq.s32.totalorder %s21, 0
      %p77 = por %p75, %p76
      %p78 = scmp.ne.s32.totalorder %s66, %s67
      %p79 = scmp.eq.s32.totalorder %s22, 1
      %p80 = por %p78, %p79
      %p82 = scmp.ne.s32.totalorder %s67, %s81
      %p83 = scmp.eq.s32.totalorder %s22, 0
      %p84 = por %p82, %p83
      %s86 = sadd.s32 %s85, 1
      %p89 = scmp.eq.s32.totalorder %s16, 1
      %p90 = scmp.ne.s32.totalorder %s85, %s87
      %p91 = scmp.eq.s32.totalorder %s16, 0
      %p92 = por %p90, %p91
      %p93 = scmp.ne.s32.totalorder %s85, %s87
      %p94 = scmp.eq.s32.totalorder %s21, 1
      %p95 = por %p93, %p94
      %p96 = scmp.ne.s32.totalorder %s87, %s88
      %p97 = scmp.eq.s32.totalorder %s21, 0
      %p98 = por %p96, %p97
      %p99 = scmp.ne.s32.totalorder %s87, %s88
      %p100 = scmp.eq.s32.totalorder %s22, 1
      %p101 = por %p99, %p100
      %p103 = scmp.ne.s32.totalorder %s88, %s102
      %p104 = scmp.eq.s32.totalorder %s22, 0
      %p105 = por %p103, %p104
      %s107 = sadd.s32 %s106, 1
      %p110 = scmp.eq.s32.totalorder %s16, 1
      %p111 = scmp.ne.s32.totalorder %s106, %s108
      %p112 = scmp.eq.s32.totalorder %s16, 0
      %p113 = por %p111, %p112
      %p114 = scmp.ne.s32.totalorder %s106, %s108
      %p115 = scmp.eq.s32.totalorder %s21, 1
      %p116 = por %p114, %p115
      %p117 = scmp.ne.s32.totalorder %s108, %s109
      %p118 = scmp.eq.s32.totalorder %s21, 0
      %p119 = por %p117, %p118
      %p120 = scmp.ne.s32.totalorder %s108, %s109
      %p121 = scmp.eq.s32.totalorder %s22, 1
      %p122 = por %p120, %p121
      %p124 = scmp.ne.s32.totalorder %s109, %s123
      %p125 = scmp.eq.s32.totalorder %s22, 0
      %p126 = por %p124, %p125
      %s127 = ssub.s32 %s23, %s35
      %s128 = ssub.s32 %s24, %s31
      %s129 = sor.u32 %s127, %s128
      %p130 = scmp.eq.s32.totalorder %s129, 0
      %s132 = sadd.s32 %s131, 1
      %s133 = scalar_select %p130, %s131, %s132
      %p136 = pneg %p130
      %p137 = scmp.eq.s32.totalorder %s16, 1
      %p138 = por %p136, %p137
      %p139 = scmp.ne.s32.totalorder %s131, %s134
      %p140 = scmp.eq.s32.totalorder %s16, 0
      %p141 = por %p139, %p140
      %p142 = scmp.ne.s32.totalorder %s131, %s134
      %p143 = scmp.eq.s32.totalorder %s21, 1
      %p144 = por %p142, %p143
      %p145 = scmp.ne.s32.totalorder %s134, %s135
      %p146 = scmp.eq.s32.totalorder %s21, 0
      %p147 = por %p145, %p146
      %p148 = scmp.ne.s32.totalorder %s134, %s135
      %p149 = scmp.eq.s32.totalorder %s22, 1
      %p150 = por %p148, %p149
      %p152 = scmp.ne.s32.totalorder %s135, %s151
      %p153 = scmp.eq.s32.totalorder %s22, 0
      %p154 = por %p152, %p153
      %p155 = scmp.le.s32.totalorder 1, %s16
      %p156 = scmp.lt.s32.totalorder %s16, 3
      %p157 = pnand %p155, %p156
      %p158 = pneg %p157
      // Predicated region
      $region9: #{tpu_custom_call.1} parent=5 // pred_check
        _
      $region10: #{tpu_custom_call.1} parent=5 // pred_check_branch
        %160 = sbr.rel (%p157) target = $region12
      $region11: #{tpu_custom_call.1} parent=5 // pred_region
        %s161 = ssub.s32 %s16, 1
        // Predicated region
        $region13: #{tpu_custom_call.1} parent=11 // pred_check
          %p162 = pneg %p77
        $region14: #{tpu_custom_call.1} parent=11 // pred_check_branch
          %164 = sbr.rel (%p162) target = $region16
        $region15: #{tpu_custom_call.1} parent=11 // pred_region
          _
        $region16: #{tpu_custom_call.1} parent=11 // pred_fallthru
          _
        // Predicated region
        $region17: #{tpu_custom_call.1} parent=11 // pred_check
          %p165 = pneg %p98
        $region18: #{tpu_custom_call.1} parent=11 // pred_check_branch
          %167 = sbr.rel (%p165) target = $region20
        $region19: #{tpu_custom_call.1} parent=11 // pred_region
          _
        $region20: #{tpu_custom_call.1} parent=11 // pred_fallthru
          _
        // Predicated region
        $region21: #{tpu_custom_call.1} parent=11 // pred_check
          %p168 = pneg %p119
        $region22: #{tpu_custom_call.1} parent=11 // pred_check_branch
          %170 = sbr.rel (%p168) target = $region24
        $region23: #{tpu_custom_call.1} parent=11 // pred_region
          _
        $region24: #{tpu_custom_call.1} parent=11 // pred_fallthru
          _
      $region12: #{tpu_custom_call.1} parent=5 // pred_fallthru
        _
      %p171 = scmp.lt.s32.totalorder %s16, 2
      // Predicated region
      $region25: #{tpu_custom_call.1} parent=5 // pred_check
        %p172 = pneg %p171
      $region26: #{tpu_custom_call.1} parent=5 // pred_check_branch
        %174 = sbr.rel (%p172) target = $region28
      $region27: #{tpu_custom_call.1} parent=5 // pred_region
        // Predicated region
        $region29: #{tpu_custom_call.1} parent=27 // pred_check
          %p175 = pneg %p50
        $region30: #{tpu_custom_call.1} parent=27 // pred_check_branch
          %177 = sbr.rel (%p175) target = $region32
        $region31: #{tpu_custom_call.1} parent=27 // pred_region
          %s178 = sand.u32 %s40, 1
          %s179 = scalar_lea.sflag [#allocation3], %s178
          %s180 = sand.u32 %s40, 1
          %s181 = smul.addr %s180, 8
          %s182 = scalar_lea.vmem [#allocation2], %s181
          %s183 = smul.u32 2, %s24
          %s185 = ssub.s32 128, 128
          %186 = vsyncadd %s179, %s185
          %s187 = smul.addr %s23, 2
          %s188 = sadd.s32 %s183, %s187
          %s189 = smul.addr %s188, 64
          %s190 = scalar_lea.hbm %s0, %s189
          %s192 = sshll.u32 %s182, 4
          %s193 = int_to_ptr.vmem [resolvable:$true] %s192
          %195 = dma.hbm_to_vmem [thread:$0]  %s190, 128, %s193, %s179
        $region32: #{tpu_custom_call.1} parent=27 // pred_fallthru
          _
      $region28: #{tpu_custom_call.1} parent=5 // pred_fallthru
        _
      %p196 = scmp.le.s32.totalorder 1, %s16
      %p197 = scmp.lt.s32.totalorder %s16, 3
      %p198 = pnand %p196, %p197
      %p199 = pneg %p198
      // Predicated region
      $region33: #{tpu_custom_call.1} parent=5 // pred_check
        _
      $region34: #{tpu_custom_call.1} parent=5 // pred_check_branch
        %201 = sbr.rel (%p198) target = $region36
      $region35: #{tpu_custom_call.1} parent=5 // pred_region
        %s202 = ssub.s32 %s16, 1
        %s203 = sand.u32 %s43, 1
        %s204 = scalar_lea.sflag [#allocation3], %s203
        %s205 = sand.u32 %s43, 1
        %s206 = smul.addr %s205, 8
        %s207 = scalar_lea.vmem [#allocation2], %s206
        // Predicated region
        $region37: #{tpu_custom_call.1} parent=35 // pred_check
          %p208 = pneg %p56
        $region38: #{tpu_custom_call.1} parent=35 // pred_check_branch
          %210 = sbr.rel (%p208) target = $region40
        $region39: #{tpu_custom_call.1} parent=35 // pred_region
          %211 = dma.done %s204, 128
        $region40: #{tpu_custom_call.1} parent=35 // pred_fallthru
          _
        %s212 = sand.u32 %s43, 1
        %s213 = scalar_lea.sflag [#allocation3], %s212
        %s214 = sand.u32 %s43, 1
        %s215 = smul.addr %s214, 8
        %s216 = scalar_lea.vmem [#allocation2], %s215
        %p217 = pneg %p56
        %p218 = pneg %p53
        %p219 = pneg %p77
        %p220 = pneg %p74
        %p221 = pneg %p98
        %p222 = pneg %p95
        %p223 = pneg %p119
        %p224 = pneg %p116
        %p225 = pneg %p147
        %p226 = pneg %p144
        %s227 = sand.u32 %s134, 1
        %s228 = scalar_lea.sflag [#allocation4], %s227
        %s229 = sand.u32 %s134, 1
        %s230 = smul.addr %s229, 8
        %s231 = scalar_lea.vmem [#allocation5], %s230
        %s232 = smul.u32 2, %s26
        %s233 = smul.u32 2, %s26
        %v235 = vld [vmem:[%s207] sm:$0xff]
        %v237 = vcombine.high %v235, %v235
        %v239 = vpack.c.bf16 %v235, %v235
        %v240 = vpack.c.bf16 %v237, %v237
        %v241 = vld [vmem:[%s1] sm:$0xf]
        %v242 = vld [vmem:[%s1 + $0x4] sm:$0xf]
        %v243 = vld [vmem:[%s1 + $0x8] sm:$0xf]
        %v244 = vld [vmem:[%s1 + $0xc] sm:$0xf]
        %v245 = vld [vmem:[%s1 + $0x10] sm:$0xf]
        %v246 = vld [vmem:[%s1 + $0x14] sm:$0xf]
        %v247 = vld [vmem:[%s1 + $0x18] sm:$0xf]
        %v248 = vld [vmem:[%s1 + $0x1c] sm:$0xf]
        %v257 = vunpack.c.l.b16 %v241
        %v258 = vunpack.c.l.b16 %v242
        %v259 = vunpack.c.l.b16 %v243
        %v260 = vunpack.c.l.b16 %v244
        %v261 = vunpack.c.l.b16 %v245
        %v262 = vunpack.c.l.b16 %v246
        %v263 = vunpack.c.l.b16 %v247
        %v264 = vunpack.c.l.b16 %v248
        %v265 = vpack.c.b16 %v258, %v257
        %v266 = vpack.c.b16 %v260, %v259
        %v267 = vpack.c.b16 %v262, %v261
        %v268 = vpack.c.b16 %v264, %v263
        %vm269 = vcmask 31744
        %v271 = vsel %vm269, %v265, 0
        %v274 = vsel %vm269, %v266, 0
        %v277 = vsel %vm269, %v267, 0
        %v280 = vsel %vm269, %v268, 0
        %vm282 = vcmask 1041408
        %v284 = vsel %vm282, %v239, 0
        %v287 = vsel %vm282, %v240, 0
        %289 = vmatprep.subr.bf16.mxu0 0
        %290 = vmatpush1.bf16.msra.mxu0 0
        %291 = vmatprep.subr.bf16.mxu0 0
        %292 = vmatpush1.bf16.msra.mxu0 0
        %293 = vmatprep.subr.bf16.mxu0 0
        %294 = vmatpush1.bf16.msra.mxu0 0
        %295 = vmatprep.subr.bf16.mxu0 0
        %296 = vmatpush1.bf16.msra.mxu0 0
        %297 = vmatprep.subr.bf16.mxu0 0
        %298 = vmatpush1.bf16.msra.mxu0 0
        %299 = vmatprep.subr.bf16.mxu0 0
        %300 = vmatpush1.bf16.msra.mxu0 0
        %301 = vmatprep.subr.bf16.mxu0 0
        %302 = vmatpush1.bf16.msra.mxu0 0
        %303 = vmatprep.subr.bf16.mxu0 %v287
        %304 = vmatpush1.bf16.msra.mxu0 %v284
        %305 = vmatprep.subr.bf16.mxu0 0
        %306 = vmatpush2.bf16.msra.mxu0 0
        %307 = vmatprep.subr.bf16.mxu0 0
        %308 = vmatpush2.bf16.msra.mxu0 0
        %309 = vmatprep.subr.bf16.mxu0 0
        %310 = vmatpush2.bf16.msra.mxu0 0
        %311 = vmatprep.subr.bf16.mxu0 0
        %312 = vmatpush2.bf16.msra.mxu0 0
        %313 = vmatprep.subr.bf16.mxu0 0
        %314 = vmatpush2.bf16.msra.mxu0 0
        %315 = vmatprep.subr.bf16.mxu0 0
        %316 = vmatpush2.bf16.msra.mxu0 0
        %317 = vmatprep.subr.bf16.mxu0 0
        %318 = vmatpush2.bf16.msra.mxu0 0
        %319 = vmatprep.subr.bf16.mxu0 0
        %320 = vmatpush2.bf16.msra.mxu0 0
        %321 = vmatprep.mubr.bf16.mxu0 0
        %322 = vmatmul.mubr.bf16.gmra.mxu0 %v271
        %v323 = vpop.f32.mrf.mxu0
        %v324 = vadd.f32 0.0, %v323
        %v325 = vpop.f32.mrf.mxu0
        %v326 = vadd.f32 0.0, %v325
        %v327 = vpop.f32.mrf.mxu0
        %v328 = vadd.f32 0.0, %v327
        %v329 = vpop.f32.mrf.mxu0
        %v330 = vadd.f32 0.0, %v329
        %331 = vmatprep.mubr.bf16.mxu0 0
        %332 = vmatmul.mubr.bf16.gmra.mxu0 %v274
        %v333 = vpop.f32.mrf.mxu0
        %v334 = vadd.f32 0.0, %v333
        %v335 = vpop.f32.mrf.mxu0
        %v336 = vadd.f32 0.0, %v335
        %v337 = vpop.f32.mrf.mxu0
        %v338 = vadd.f32 0.0, %v337
        %v339 = vpop.f32.mrf.mxu0
        %v340 = vadd.f32 0.0, %v339
        %341 = vmatprep.mubr.bf16.mxu0 0
        %342 = vmatmul.mubr.bf16.gmra.mxu0 %v277
        %v343 = vpop.f32.mrf.mxu0
        %v344 = vadd.f32 0.0, %v343
        %v345 = vpop.f32.mrf.mxu0
        %v346 = vadd.f32 0.0, %v345
        %v347 = vpop.f32.mrf.mxu0
        %v348 = vadd.f32 0.0, %v347
        %v349 = vpop.f32.mrf.mxu0
        %v350 = vadd.f32 0.0, %v349
        %351 = vmatprep.mubr.bf16.mxu0 0
        %352 = vmatmul.mubr.bf16.gmra.mxu0 %v280
        %v353 = vpop.f32.mrf.mxu0
        %v354 = vadd.f32 0.0, %v353
        %v355 = vpop.f32.mrf.mxu0
        %v356 = vadd.f32 0.0, %v355
        %v357 = vpop.f32.mrf.mxu0
        %v358 = vadd.f32 0.0, %v357
        %v359 = vpop.f32.mrf.mxu0
        %v360 = vadd.f32 0.0, %v359
        %361 = vdwg.mxu0
        %v362 = vmax.f32 %v324, 0.0
        %v363 = vmax.f32 %v326, 0.0
        %v364 = vmax.f32 %v328, 0.0
        %v365 = vmax.f32 %v330, 0.0
        %v366 = vmax.f32 %v334, 0.0
        %v367 = vmax.f32 %v336, 0.0
        %v368 = vmax.f32 %v338, 0.0
        %v369 = vmax.f32 %v340, 0.0
        %v370 = vmax.f32 %v344, 0.0
        %v371 = vmax.f32 %v346, 0.0
        %v372 = vmax.f32 %v348, 0.0
        %v373 = vmax.f32 %v350, 0.0
        %v374 = vmax.f32 %v354, 0.0
        %v375 = vmax.f32 %v356, 0.0
        %v376 = vmax.f32 %v358, 0.0
        %v377 = vmax.f32 %v360, 0.0
        %v378 = vpack.c.bf16 %v364, %v362
        %v379 = vpack.c.bf16 %v365, %v363
        %v380 = vpack.c.bf16 %v368, %v366
        %v381 = vpack.c.bf16 %v369, %v367
        %v382 = vpack.c.bf16 %v372, %v370
        %v383 = vpack.c.bf16 %v373, %v371
        %v384 = vpack.c.bf16 %v376, %v374
        %v385 = vpack.c.bf16 %v377, %v375
        %v386 = vld [vmem:[%s2] sm:$0xf]
        %v387 = vld [vmem:[%s2 + $0x4] sm:$0xf]
        %v388 = vld [vmem:[%s2 + $0x8] sm:$0xf]
        %v389 = vld [vmem:[%s2 + $0xc] sm:$0xf]
        %v390 = vld [vmem:[%s2 + $0x10] sm:$0xf]
        %v391 = vld [vmem:[%s2 + $0x14] sm:$0xf]
        %v392 = vld [vmem:[%s2 + $0x18] sm:$0xf]
        %v393 = vld [vmem:[%s2 + $0x1c] sm:$0xf]
        %v402 = vunpack.c.l.b16 %v386
        %v403 = vunpack.c.l.b16 %v387
        %v404 = vunpack.c.l.b16 %v388
        %v405 = vunpack.c.l.b16 %v389
        %v406 = vunpack.c.l.b16 %v390
        %v407 = vunpack.c.l.b16 %v391
        %v408 = vunpack.c.l.b16 %v392
        %v409 = vunpack.c.l.b16 %v393
        %v410 = vpack.c.b16 %v403, %v402
        %v411 = vpack.c.b16 %v405, %v404
        %v412 = vpack.c.b16 %v407, %v406
        %v413 = vpack.c.b16 %v409, %v408
        %vm414 = vcmask 523264
        %v416 = vsel %vm414, %v410, 0
        %v419 = vsel %vm414, %v411, 0
        %v422 = vsel %vm414, %v412, 0
        %v425 = vsel %vm414, %v413, 0
        %427 = vmatprep.subr.bf16.mxu0 0
        %428 = vmatpush1.bf16.msra.mxu0 0
        %429 = vmatprep.subr.bf16.mxu0 0
        %430 = vmatpush1.bf16.msra.mxu0 0
        %431 = vmatprep.subr.bf16.mxu0 0
        %432 = vmatpush1.bf16.msra.mxu0 0
        %433 = vmatprep.subr.bf16.mxu0 0
        %434 = vmatpush1.bf16.msra.mxu0 0
        %435 = vmatprep.subr.bf16.mxu0 %v385
        %436 = vmatpush1.bf16.msra.mxu0 %v384
        %437 = vmatprep.subr.bf16.mxu0 %v383
        %438 = vmatpush1.bf16.msra.mxu0 %v382
        %439 = vmatprep.subr.bf16.mxu0 %v381
        %440 = vmatpush1.bf16.msra.mxu0 %v380
        %441 = vmatprep.subr.bf16.mxu0 %v379
        %442 = vmatpush1.bf16.msra.mxu0 %v378
        %443 = vmatprep.subr.bf16.mxu0 0
        %444 = vmatpush2.bf16.msra.mxu0 0
        %445 = vmatprep.subr.bf16.mxu0 0
        %446 = vmatpush2.bf16.msra.mxu0 0
        %447 = vmatprep.subr.bf16.mxu0 0
        %448 = vmatpush2.bf16.msra.mxu0 0
        %449 = vmatprep.subr.bf16.mxu0 0
        %450 = vmatpush2.bf16.msra.mxu0 0
        %451 = vmatprep.subr.bf16.mxu0 0
        %452 = vmatpush2.bf16.msra.mxu0 0
        %453 = vmatprep.subr.bf16.mxu0 0
        %454 = vmatpush2.bf16.msra.mxu0 0
        %455 = vmatprep.subr.bf16.mxu0 0
        %456 = vmatpush2.bf16.msra.mxu0 0
        %457 = vmatprep.subr.bf16.mxu0 0
        %458 = vmatpush2.bf16.msra.mxu0 0
        %459 = vmatprep.mubr.bf16.mxu0 0
        %460 = vmatmul.mubr.bf16.gmra.mxu0 %v416
        %v461 = vpop.f32.mrf.mxu0
        %v462 = vadd.f32 0.0, %v461
        %v463 = vpop.f32.mrf.mxu0
        %v464 = vadd.f32 0.0, %v463
        %v465 = vpop.f32.mrf.mxu0
        %v466 = vadd.f32 0.0, %v465
        %v467 = vpop.f32.mrf.mxu0
        %v468 = vadd.f32 0.0, %v467
        %469 = vmatprep.mubr.bf16.mxu0 0
        %470 = vmatmul.mubr.bf16.gmra.mxu0 %v419
        %v471 = vpop.f32.mrf.mxu0
        %v472 = vadd.f32 0.0, %v471
        %v473 = vpop.f32.mrf.mxu0
        %v474 = vadd.f32 0.0, %v473
        %v475 = vpop.f32.mrf.mxu0
        %v476 = vadd.f32 0.0, %v475
        %v477 = vpop.f32.mrf.mxu0
        %v478 = vadd.f32 0.0, %v477
        %479 = vmatprep.mubr.bf16.mxu0 0
        %480 = vmatmul.mubr.bf16.gmra.mxu0 %v422
        %v481 = vpop.f32.mrf.mxu0
        %v482 = vadd.f32 0.0, %v481
        %v483 = vpop.f32.mrf.mxu0
        %v484 = vadd.f32 0.0, %v483
        %v485 = vpop.f32.mrf.mxu0
        %v486 = vadd.f32 0.0, %v485
        %v487 = vpop.f32.mrf.mxu0
        %v488 = vadd.f32 0.0, %v487
        %489 = vmatprep.mubr.bf16.mxu0 0
        %490 = vmatmul.mubr.bf16.gmra.mxu0 %v425
        %v491 = vpop.f32.mrf.mxu0
        %v492 = vadd.f32 0.0, %v491
        %v493 = vpop.f32.mrf.mxu0
        %v494 = vadd.f32 0.0, %v493
        %v495 = vpop.f32.mrf.mxu0
        %v496 = vadd.f32 0.0, %v495
        %v497 = vpop.f32.mrf.mxu0
        %v498 = vadd.f32 0.0, %v497
        %499 = vdwg.mxu0
        %v500 = vmax.f32 %v462, 0.0
        %v501 = vmax.f32 %v464, 0.0
        %v502 = vmax.f32 %v466, 0.0
        %v503 = vmax.f32 %v468, 0.0
        %v504 = vmax.f32 %v472, 0.0
        %v505 = vmax.f32 %v474, 0.0
        %v506 = vmax.f32 %v476, 0.0
        %v507 = vmax.f32 %v478, 0.0
        %v508 = vmax.f32 %v482, 0.0
        %v509 = vmax.f32 %v484, 0.0
        %v510 = vmax.f32 %v486, 0.0
        %v511 = vmax.f32 %v488, 0.0
        %v512 = vmax.f32 %v492, 0.0
        %v513 = vmax.f32 %v494, 0.0
        %v514 = vmax.f32 %v496, 0.0
        %v515 = vmax.f32 %v498, 0.0
        %v516 = vpack.c.bf16 %v502, %v500
        %v517 = vpack.c.bf16 %v503, %v501
        %v518 = vpack.c.bf16 %v506, %v504
        %v519 = vpack.c.bf16 %v507, %v505
        %v520 = vpack.c.bf16 %v510, %v508
        %v521 = vpack.c.bf16 %v511, %v509
        %v522 = vpack.c.bf16 %v514, %v512
        %v523 = vpack.c.bf16 %v515, %v513
        %v524 = vld [vmem:[%s3] sm:$0x3]
        %v526 = vsel %vm414, %v524, 0
        %528 = vmatprep.subr.bf16.mxu0 0
        %529 = vmatpush1.bf16.msra.mxu0 0
        %530 = vmatprep.subr.bf16.mxu0 0
        %531 = vmatpush1.bf16.msra.mxu0 0
        %532 = vmatprep.subr.bf16.mxu0 0
        %533 = vmatpush1.bf16.msra.mxu0 0
        %534 = vmatprep.subr.bf16.mxu0 0
        %535 = vmatpush1.bf16.msra.mxu0 0
        %536 = vmatprep.subr.bf16.mxu0 %v523
        %537 = vmatpush1.bf16.msra.mxu0 %v522
        %538 = vmatprep.subr.bf16.mxu0 %v521
        %539 = vmatpush1.bf16.msra.mxu0 %v520
        %540 = vmatprep.subr.bf16.mxu0 %v519
        %541 = vmatpush1.bf16.msra.mxu0 %v518
        %542 = vmatprep.subr.bf16.mxu0 %v517
        %543 = vmatpush1.bf16.msra.mxu0 %v516
        %544 = vmatprep.subr.bf16.mxu0 0
        %545 = vmatpush2.bf16.msra.mxu0 0
        %546 = vmatprep.subr.bf16.mxu0 0
        %547 = vmatpush2.bf16.msra.mxu0 0
        %548 = vmatprep.subr.bf16.mxu0 0
        %549 = vmatpush2.bf16.msra.mxu0 0
        %550 = vmatprep.subr.bf16.mxu0 0
        %551 = vmatpush2.bf16.msra.mxu0 0
        %552 = vmatprep.subr.bf16.mxu0 0
        %553 = vmatpush2.bf16.msra.mxu0 0
        %554 = vmatprep.subr.bf16.mxu0 0
        %555 = vmatpush2.bf16.msra.mxu0 0
        %556 = vmatprep.subr.bf16.mxu0 0
        %557 = vmatpush2.bf16.msra.mxu0 0
        %558 = vmatprep.subr.bf16.mxu0 0
        %559 = vmatpush2.bf16.msra.mxu0 0
        %560 = vmatprep.mubr.bf16.mxu0 0
        %561 = vmatmul.mubr.bf16.gmra.mxu0 %v526
        %v562 = vpop.f32.mrf.mxu0
        %v563 = vadd.f32 %v235, %v562
        %v564 = vpop.f32.mrf.mxu0
        %v565 = vadd.f32 %v237, %v564
        %v566 = vpop.f32.mrf.mxu0
        %v567 = vpop.f32.mrf.mxu0
        %568 = vdwg.mxu0
        %v571 = vcombine.low %v563, %v565
        %573 = vst [vmem:[%s231] sm:$0xff] %v571
        %s574 = sand.u32 %s134, 1
        %s575 = scalar_lea.sflag [#allocation4], %s574
        %s576 = sand.u32 %s134, 1
        %s577 = smul.addr %s576, 8
        %s578 = scalar_lea.vmem [#allocation5], %s577
        // Predicated region
        $region41: #{tpu_custom_call.1} parent=35 // pred_check
          %p579 = pneg %p144
        $region42: #{tpu_custom_call.1} parent=35 // pred_check_branch
          %581 = sbr.rel (%p579) target = $region44
        $region43: #{tpu_custom_call.1} parent=35 // pred_region
          %s582 = smul.u32 2, %s26
          %s584 = ssub.s32 128, 128
          %585 = vsyncadd %s575, %s584
          %s586 = smul.addr %s25, 2
          %s587 = sadd.s32 %s582, %s586
          %s588 = smul.addr %s587, 64
          %s589 = scalar_lea.hbm %s4, %s588
          %s591 = sshll.u32 %s578, 4
          %s592 = int_to_ptr.vmem [resolvable:$true] %s591
          %594 = dma.vmem_to_hbm [thread:$0]  %s592, 128, %s589, %s575
        $region44: #{tpu_custom_call.1} parent=35 // pred_fallthru
          _
      $region36: #{tpu_custom_call.1} parent=5 // pred_fallthru
        _
      %p595 = scmp.le.s32.totalorder 2, %s16
      // Predicated region
      $region45: #{tpu_custom_call.1} parent=5 // pred_check
        %p596 = pneg %p595
      $region46: #{tpu_custom_call.1} parent=5 // pred_check_branch
        %598 = sbr.rel (%p596) target = $region48
      $region47: #{tpu_custom_call.1} parent=5 // pred_region
        %s599 = ssub.s32 %s16, 2
        // Predicated region
        $region49: #{tpu_custom_call.1} parent=47 // pred_check
          %p600 = pneg %p150
        $region50: #{tpu_custom_call.1} parent=47 // pred_check_branch
          %602 = sbr.rel (%p600) target = $region52
        $region51: #{tpu_custom_call.1} parent=47 // pred_region
          %s603 = sand.u32 %s135, 1
          %s604 = scalar_lea.sflag [#allocation4], %s603
          %s605 = sand.u32 %s135, 1
          %s606 = smul.addr %s605, 8
          %s607 = scalar_lea.vmem [#allocation5], %s606
          %608 = dma.done %s604, 128
        $region52: #{tpu_custom_call.1} parent=47 // pred_fallthru
          _
      $region48: #{tpu_custom_call.1} parent=5 // pred_fallthru
        _
    $region6: #{tpu_custom_call.1} parent=1 // loop_footer
      %s20 = sadd.s32 1, %s16
    $region7: #{tpu_custom_call.1} parent=1 // loop_footer_branch
      %15 = sbr.rel target = $region3
    $region8: #{tpu_custom_call.1} parent=1 // loop_exit
      _
    %609 = vsyncpa [#allocation3], 1
    %s610 = scalar_lea.sflag [#allocation3], 1
    %611 = vsyncpa %s610, 1
    %612 = vsyncpa [#allocation4], 1
    %s613 = scalar_lea.sflag [#allocation4], 1
    %614 = vsyncpa %s613, 1

</llo_original>
